<compile_context>
chip_gen: v5e
topology: v5e:2x2
jax: 0.10.0
libtpu: 0.0.40
codegen_flags: <defaults>
</compile_context>

<pallas_src>
import functools

import jax
import jax.numpy as jnp
from jax.experimental import pallas as pl
from jax.experimental.pallas import tpu as pltpu


OUT_PAD = 8  # lane-padded fc3 output width (== full array last dim)


def _round_up(n, m):
    return ((n + m - 1) // m) * m


def _silu(h):
    # SiLU = h * sigmoid(h) = h / (1 + exp(-h)); exp -> EUP, approx recip -> EUP.
    return h * pl.reciprocal(1.0 + jnp.exp(-h), approx=True)


def mlp_denoiser_kernel(xt_ref,
                        wte1_ref, bte1_ref,
                        wfc1x_ref, wfc1t_ref, bfc1_ref,
                        wfc2_ref, bfc2_ref,
                        wfc3_ref, bfc3_ref,
                        out_ref, *, input_dim):
    f32 = jnp.float32
    bf16 = jnp.bfloat16

    xt = xt_ref[...]                               # (TB, 8) f32: [x..., t, 0...]
    t = xt[:, input_dim:input_dim + 1]             # (TB, 1)

    # ---- time embedding, first linear: Linear(1, T) -> SiLU ----
    # K=1 linear is a broadcasted VPU multiply (no MXU pass).
    h = t * wte1_ref[...] + bte1_ref[...]          # (TB, T) f32
    h = _silu(h)

    # ---- fused (te2 -> fc1 t-branch) + fc1 x-branch ----
    # te2 and fc1 are separated only by a concat, so te2 is folded into fc1's
    # t-columns in the wrapper; here it is a single MXU dot.
    h1 = (jnp.dot(h.astype(bf16), wfc1t_ref[...], preferred_element_type=f32)
          + bfc1_ref[...])                         # (TB, H) f32
    w1x = wfc1x_ref[...]                           # (D, H) f32
    for d in range(input_dim):                     # static unroll: D VPU FMAs
        h1 = h1 + xt[:, d:d + 1] * w1x[d:d + 1, :]
    h1 = _silu(h1)

    # ---- fc2 ----
    h2 = (jnp.dot(h1.astype(bf16), wfc2_ref[...], preferred_element_type=f32)
          + bfc2_ref[...])
    h2 = _silu(h2)

    # ---- fc3 (no activation); weight/bias zero-padded to OUT_PAD lanes ----
    out = (jnp.dot(h2.astype(bf16), wfc3_ref[...], preferred_element_type=f32)
           + bfc3_ref[...])                        # (TB, OUT_PAD) f32
    out_ref[...] = out.astype(out_ref.dtype)


def init_params(key, input_dim=3, hidden_dim=128, time_embed_dim=32):
    """Deterministic synthetic init (shapes match the PyTorch module)."""
    ks = jax.random.split(key, 10)
    scale = 0.05

    def w(k, shape):
        return (scale * jax.random.normal(k, shape)).astype(jnp.float32)

    return {
        # nn.Linear stores weight as (out, in); keep that convention here.
        "te1_w": w(ks[0], (time_embed_dim, 1)),
        "te1_b": w(ks[1], (time_embed_dim,)),
        "te2_w": w(ks[2], (time_embed_dim, time_embed_dim)),
        "te2_b": w(ks[3], (time_embed_dim,)),
        "fc1_w": w(ks[4], (hidden_dim, input_dim + time_embed_dim)),
        "fc1_b": w(ks[5], (hidden_dim,)),
        "fc2_w": w(ks[6], (hidden_dim, hidden_dim)),
        "fc2_b": w(ks[7], (hidden_dim,)),
        "fc3_w": w(ks[8], (input_dim, hidden_dim)),
        "fc3_b": w(ks[9], (input_dim,)),
    }


def mlp_denoiser(x, t, params, input_dim=3, block_b=4096):
    """x: (B, input_dim) float32, t: (B,) any numeric dtype."""
    B, D = x.shape
    assert D == input_dim
    T = params["te2_w"].shape[0]
    H = params["fc2_w"].shape[0]
    f32, bf16 = jnp.float32, jnp.bfloat16

    # ---- pack [x | t | zero-pad] into one lane-aligned 8-wide input ----
    packed_w = _round_up(input_dim + 1, 8)
    t2 = t.reshape(B, 1).astype(f32)
    xt = jnp.concatenate(
        [x.astype(f32), t2, jnp.zeros((B, packed_w - input_dim - 1), f32)],
        axis=-1)

    # ---- batch tile: large (amortizes ~0.35us/step pipeline overhead) but
    #      capped at ceil(B/2) so grid >= 2 steps (keeps both v7x TCs busy) ----
    B8 = _round_up(B, 8)
    TB = min(block_b, max(8, _round_up(B8 // 2, 8)))
    B_pad = _round_up(B, TB)
    if B_pad != B:
        xt = jnp.pad(xt, ((0, B_pad - B), (0, 0)))

    # ---- weights in [in, out] layout; bf16 MXU operands, f32 biases ----
    wte1 = params["te1_w"].T.astype(f32)                     # (1, T)
    bte1 = params["te1_b"].reshape(1, T).astype(f32)

    # Fold te2 into fc1's t-branch (no nonlinearity between them):
    #   (h @ Wte2.T + bte2) @ W1t + b1 == h @ (Wte2.T @ W1t) + (bte2 @ W1t + b1)
    # Fused weight computed in f32, then a single bf16 cast.
    wfc1 = params["fc1_w"].T.astype(f32)                     # (D+T, H)
    wfc1x = wfc1[:input_dim]                                 # (D, H) -> VPU FMAs
    wfc1t = wfc1[input_dim:]                                 # (T, H)
    wte2t = params["te2_w"].T.astype(f32)                    # (T, T)
    wfc1t_fused = (wte2t @ wfc1t).astype(bf16)               # (T, H)
    bfc1_fused = (params["te2_b"].reshape(1, T).astype(f32) @ wfc1t
                  + params["fc1_b"].reshape(1, H).astype(f32))  # (1, H) f32

    wfc2 = params["fc2_w"].T.astype(bf16)                    # (H, H)
    bfc2 = params["fc2_b"].reshape(1, H).astype(f32)

    wfc3 = jnp.zeros((H, OUT_PAD), bf16).at[:, :input_dim].set(
        params["fc3_w"].T.astype(bf16))                      # (H, 8) lane-padded
    bfc3 = jnp.zeros((1, OUT_PAD), f32).at[:, :input_dim].set(
        params["fc3_b"].reshape(1, input_dim).astype(f32))

    weights = (wte1, bte1, wfc1x, wfc1t_fused, bfc1_fused,
               wfc2, bfc2, wfc3, bfc3)

    grid = (B_pad // TB,)
    weight_specs = [pl.BlockSpec(w.shape, lambda i: (0, 0)) for w in weights]
    in_specs = [pl.BlockSpec((TB, packed_w), lambda i: (i, 0))] + weight_specs
    out_specs = pl.BlockSpec((TB, OUT_PAD), lambda i: (i, 0))

    # ---- per-generation scoped-VMEM sizing (v7x only has 64 MiB physical) ----
    try:
        vmem_cap = int(pltpu.get_tpu_info().vmem_capacity_bytes)
    except Exception:
        vmem_cap = 64 * 1024 * 1024
    vmem_limit = int(min(vmem_cap // 2, 64 * 1024 * 1024))

    flops = 2 * B_pad * (T + T * H + input_dim * H + H * H + H * OUT_PAD)
    transcendentals = B_pad * (T + 2 * H)
    bytes_accessed = int(xt.size * 4 + B_pad * OUT_PAD * 4
                         + sum(int(w.size) * w.dtype.itemsize for w in weights))

    out_padded = pl.pallas_call(
        functools.partial(mlp_denoiser_kernel, input_dim=input_dim),
        out_shape=jax.ShapeDtypeStruct((B_pad, OUT_PAD), f32),
        grid=grid,
        in_specs=in_specs,
        out_specs=out_specs,
        compiler_params=pltpu.CompilerParams(
            dimension_semantics=("parallel",),
            vmem_limit_bytes=vmem_limit),
        cost_estimate=pl.CostEstimate(
            flops=flops,
            transcendentals=transcendentals,
            bytes_accessed=bytes_accessed),
    )(xt, *weights)

    return out_padded[:B, :input_dim]


def mlp_denoiser_ref(x, t, params):
    """Pure-JAX f32 reference (mirrors the PyTorch forward)."""
    def silu(v):
        return v * jax.nn.sigmoid(v)

    t2 = t.reshape(-1, 1).astype(jnp.float32)
    h = silu(t2 @ params["te1_w"].T + params["te1_b"])
    t_embed = h @ params["te2_w"].T + params["te2_b"]
    xc = jnp.concatenate([x, t_embed], axis=-1)
    h1 = silu(xc @ params["fc1_w"].T + params["fc1_b"])
    h2 = silu(h1 @ params["fc2_w"].T + params["fc2_b"])
    return h2 @ params["fc3_w"].T + params["fc3_b"]


if __name__ == "__main__":
    INPUT_DIM, HIDDEN_DIM, TIME_EMBED_DIM = 3, 128, 32
    BATCH = 8

    key = jax.random.PRNGKey(0)
    k_params, k_x, k_t = jax.random.split(key, 3)

    params = init_params(k_params, INPUT_DIM, HIDDEN_DIM, TIME_EMBED_DIM)
    x = jax.random.normal(k_x, (BATCH, INPUT_DIM), dtype=jnp.float32)
    t = jax.random.randint(k_t, (BATCH,), 0, 1000).astype(jnp.float32)

    out = mlp_denoiser(x, t, params, input_dim=INPUT_DIM)
    out = jax.block_until_ready(out)

    ref = mlp_denoiser_ref(x, t, params)
    assert out.shape == (BATCH, INPUT_DIM)
    # bf16 MXU operands (f32 acc) + approx-reciprocal SiLU -> loose tolerance.
    assert jnp.allclose(out, ref, atol=5e-2, rtol=5e-2), (
        "mismatch vs reference: max err "
        f"{float(jnp.max(jnp.abs(out - ref)))}")

    print("KERNEL_OK")
</pallas_src>

<mosaic_0001>
module attributes {stable_mosaic.version = 11 : i64} {
  func.func @mlp_denoiser_kernel(%arg0: i32, %arg1: memref<8x8xf32, #tpu.memory_space<vmem>>, %arg2: memref<1x32xf32, #tpu.memory_space<vmem>>, %arg3: memref<1x32xf32, #tpu.memory_space<vmem>>, %arg4: memref<3x128xf32, #tpu.memory_space<vmem>>, %arg5: memref<32x128xbf16, #tpu.memory_space<vmem>>, %arg6: memref<1x128xf32, #tpu.memory_space<vmem>>, %arg7: memref<128x128xbf16, #tpu.memory_space<vmem>>, %arg8: memref<1x128xf32, #tpu.memory_space<vmem>>, %arg9: memref<128x8xbf16, #tpu.memory_space<vmem>>, %arg10: memref<1x8xf32, #tpu.memory_space<vmem>>, %arg11: memref<8x8xf32, #tpu.memory_space<vmem>>) attributes {dimension_semantics = [#tpu.dimension_semantics<parallel>], iteration_bounds = array<i64: 1>, scalar_prefetch = 0 : i64, scratch_operands = 0 : i64, tpu.core_type = #tpu.core_type<tc>, window_params = [{transform_indices = @transform_0, window_bounds = array<i64: 8, 8>}, {pipeline_mode = #tpu.pipeline_mode<synchronous>, transform_indices = @transform_1, window_bounds = array<i64: 1, 32>}, {pipeline_mode = #tpu.pipeline_mode<synchronous>, transform_indices = @transform_2, window_bounds = array<i64: 1, 32>}, {pipeline_mode = #tpu.pipeline_mode<synchronous>, transform_indices = @transform_3, window_bounds = array<i64: 3, 128>}, {pipeline_mode = #tpu.pipeline_mode<synchronous>, transform_indices = @transform_4, window_bounds = array<i64: 32, 128>}, {pipeline_mode = #tpu.pipeline_mode<synchronous>, transform_indices = @transform_5, window_bounds = array<i64: 1, 128>}, {pipeline_mode = #tpu.pipeline_mode<synchronous>, transform_indices = @transform_6, window_bounds = array<i64: 128, 128>}, {pipeline_mode = #tpu.pipeline_mode<synchronous>, transform_indices = @transform_7, window_bounds = array<i64: 1, 128>}, {pipeline_mode = #tpu.pipeline_mode<synchronous>, transform_indices = @transform_8, window_bounds = array<i64: 128, 8>}, {pipeline_mode = #tpu.pipeline_mode<synchronous>, transform_indices = @transform_9, window_bounds = array<i64: 1, 8>}, {transform_indices = @transform_10, window_bounds = array<i64: 8, 8>}]} {
    %c0 = arith.constant 0 : index
    %c0_0 = arith.constant 0 : index
    %0 = vector.load %arg1[%c0, %c0_0] : memref<8x8xf32, #tpu.memory_space<vmem>>, vector<8x8xf32>
    %1 = vector.extract_strided_slice %0 {offsets = [0, 3], sizes = [8, 1], strides = [1, 1]} : vector<8x8xf32> to vector<8x1xf32>
    %c0_1 = arith.constant 0 : index
    %c0_2 = arith.constant 0 : index
    %2 = vector.load %arg2[%c0_1, %c0_2] : memref<1x32xf32, #tpu.memory_space<vmem>>, vector<1x32xf32>
    %3 = vector.broadcast %1 : vector<8x1xf32> to vector<8x32xf32>
    %4 = vector.broadcast %2 : vector<1x32xf32> to vector<8x32xf32>
    %5 = arith.mulf %3, %4 : vector<8x32xf32>
    %c0_3 = arith.constant 0 : index
    %c0_4 = arith.constant 0 : index
    %6 = vector.load %arg3[%c0_3, %c0_4] : memref<1x32xf32, #tpu.memory_space<vmem>>, vector<1x32xf32>
    %7 = vector.broadcast %6 : vector<1x32xf32> to vector<8x32xf32>
    %8 = arith.addf %5, %7 : vector<8x32xf32>
    %cst = arith.constant 0.000000e+00 : f32
    %9 = vector.broadcast %cst : f32 to vector<8x32xf32>
    %10 = arith.subf %9, %8 : vector<8x32xf32>
    %11 = math.exp %10 : vector<8x32xf32>
    %cst_5 = arith.constant 1.000000e+00 : f32
    %12 = vector.broadcast %cst_5 : f32 to vector<8x32xf32>
    %13 = arith.addf %12, %11 : vector<8x32xf32>
    %14 = tpu.reciprocal %13 {approx = true} : vector<8x32xf32> -> vector<8x32xf32>
    %15 = arith.mulf %8, %14 : vector<8x32xf32>
    %16 = arith.truncf %15 : vector<8x32xf32> to vector<8x32xbf16>
    %c0_6 = arith.constant 0 : index
    %c0_7 = arith.constant 0 : index
    %17 = vector.load %arg5[%c0_6, %c0_7] : memref<32x128xbf16, #tpu.memory_space<vmem>>, vector<32x128xbf16>
    %cst_8 = arith.constant dense<0.000000e+00> : vector<8x128xf32>
    %18 = tpu.matmul %16, %17, %cst_8 {dimension_numbers = #tpu.dot_dimension_numbers<[1], [0], [0], [1], [0, 0, 1, 1], [], []>} : vector<8x32xbf16>, vector<32x128xbf16>, vector<8x128xf32> -> vector<8x128xf32>
    %c0_9 = arith.constant 0 : index
    %c0_10 = arith.constant 0 : index
    %19 = vector.load %arg6[%c0_9, %c0_10] : memref<1x128xf32, #tpu.memory_space<vmem>>, vector<1x128xf32>
    %20 = vector.broadcast %19 : vector<1x128xf32> to vector<8x128xf32>
    %21 = arith.addf %18, %20 : vector<8x128xf32>
    %c0_11 = arith.constant 0 : index
    %c0_12 = arith.constant 0 : index
    %22 = vector.load %arg4[%c0_11, %c0_12] : memref<3x128xf32, #tpu.memory_space<vmem>>, vector<3x128xf32>
    %23 = vector.extract_strided_slice %0 {offsets = [0, 0], sizes = [8, 1], strides = [1, 1]} : vector<8x8xf32> to vector<8x1xf32>
    %24 = vector.extract_strided_slice %22 {offsets = [0, 0], sizes = [1, 128], strides = [1, 1]} : vector<3x128xf32> to vector<1x128xf32>
    %25 = vector.broadcast %23 : vector<8x1xf32> to vector<8x128xf32>
    %26 = vector.broadcast %24 : vector<1x128xf32> to vector<8x128xf32>
    %27 = arith.mulf %25, %26 : vector<8x128xf32>
    %28 = arith.addf %21, %27 : vector<8x128xf32>
    %29 = vector.extract_strided_slice %0 {offsets = [0, 1], sizes = [8, 1], strides = [1, 1]} : vector<8x8xf32> to vector<8x1xf32>
    %30 = vector.extract_strided_slice %22 {offsets = [1, 0], sizes = [1, 128], strides = [1, 1]} : vector<3x128xf32> to vector<1x128xf32>
    %31 = vector.broadcast %29 : vector<8x1xf32> to vector<8x128xf32>
    %32 = vector.broadcast %30 : vector<1x128xf32> to vector<8x128xf32>
    %33 = arith.mulf %31, %32 : vector<8x128xf32>
    %34 = arith.addf %28, %33 : vector<8x128xf32>
    %35 = vector.extract_strided_slice %0 {offsets = [0, 2], sizes = [8, 1], strides = [1, 1]} : vector<8x8xf32> to vector<8x1xf32>
    %36 = vector.extract_strided_slice %22 {offsets = [2, 0], sizes = [1, 128], strides = [1, 1]} : vector<3x128xf32> to vector<1x128xf32>
    %37 = vector.broadcast %35 : vector<8x1xf32> to vector<8x128xf32>
    %38 = vector.broadcast %36 : vector<1x128xf32> to vector<8x128xf32>
    %39 = arith.mulf %37, %38 : vector<8x128xf32>
    %40 = arith.addf %34, %39 : vector<8x128xf32>
    %cst_13 = arith.constant 0.000000e+00 : f32
    %41 = vector.broadcast %cst_13 : f32 to vector<8x128xf32>
    %42 = arith.subf %41, %40 : vector<8x128xf32>
    %43 = math.exp %42 : vector<8x128xf32>
    %cst_14 = arith.constant 1.000000e+00 : f32
    %44 = vector.broadcast %cst_14 : f32 to vector<8x128xf32>
    %45 = arith.addf %44, %43 : vector<8x128xf32>
    %46 = tpu.reciprocal %45 {approx = true} : vector<8x128xf32> -> vector<8x128xf32>
    %47 = arith.mulf %40, %46 : vector<8x128xf32>
    %48 = arith.truncf %47 : vector<8x128xf32> to vector<8x128xbf16>
    %c0_15 = arith.constant 0 : index
    %c0_16 = arith.constant 0 : index
    %49 = vector.load %arg7[%c0_15, %c0_16] : memref<128x128xbf16, #tpu.memory_space<vmem>>, vector<128x128xbf16>
    %cst_17 = arith.constant dense<0.000000e+00> : vector<8x128xf32>
    %50 = tpu.matmul %48, %49, %cst_17 {dimension_numbers = #tpu.dot_dimension_numbers<[1], [0], [0], [1], [0, 0, 1, 1], [], []>} : vector<8x128xbf16>, vector<128x128xbf16>, vector<8x128xf32> -> vector<8x128xf32>
    %c0_18 = arith.constant 0 : index
    %c0_19 = arith.constant 0 : index
    %51 = vector.load %arg8[%c0_18, %c0_19] : memref<1x128xf32, #tpu.memory_space<vmem>>, vector<1x128xf32>
    %52 = vector.broadcast %51 : vector<1x128xf32> to vector<8x128xf32>
    %53 = arith.addf %50, %52 : vector<8x128xf32>
    %cst_20 = arith.constant 0.000000e+00 : f32
    %54 = vector.broadcast %cst_20 : f32 to vector<8x128xf32>
    %55 = arith.subf %54, %53 : vector<8x128xf32>
    %56 = math.exp %55 : vector<8x128xf32>
    %cst_21 = arith.constant 1.000000e+00 : f32
    %57 = vector.broadcast %cst_21 : f32 to vector<8x128xf32>
    %58 = arith.addf %57, %56 : vector<8x128xf32>
    %59 = tpu.reciprocal %58 {approx = true} : vector<8x128xf32> -> vector<8x128xf32>
    %60 = arith.mulf %53, %59 : vector<8x128xf32>
    %61 = arith.truncf %60 : vector<8x128xf32> to vector<8x128xbf16>
    %c0_22 = arith.constant 0 : index
    %c0_23 = arith.constant 0 : index
    %62 = vector.load %arg9[%c0_22, %c0_23] : memref<128x8xbf16, #tpu.memory_space<vmem>>, vector<128x8xbf16>
    %cst_24 = arith.constant dense<0.000000e+00> : vector<8x8xf32>
    %63 = tpu.matmul %61, %62, %cst_24 {dimension_numbers = #tpu.dot_dimension_numbers<[1], [0], [0], [1], [0, 0, 1, 1], [], []>} : vector<8x128xbf16>, vector<128x8xbf16>, vector<8x8xf32> -> vector<8x8xf32>
    %c0_25 = arith.constant 0 : index
    %c0_26 = arith.constant 0 : index
    %64 = vector.load %arg10[%c0_25, %c0_26] : memref<1x8xf32, #tpu.memory_space<vmem>>, vector<1x8xf32>
    %65 = vector.broadcast %64 : vector<1x8xf32> to vector<8x8xf32>
    %66 = arith.addf %63, %65 : vector<8x8xf32>
    %c0_27 = arith.constant 0 : index
    %c0_28 = arith.constant 0 : index
    %67 = vector.load %arg11[%c0_27, %c0_28] : memref<8x8xf32, #tpu.memory_space<vmem>>, vector<8x8xf32>
    tpu.vector_store %arg11[%c0_27, %c0_28], %66 {strides = array<i32>} : memref<8x8xf32, #tpu.memory_space<vmem>>, vector<8x8xf32>,
    return
  }
  func.func @transform_0(%arg0: i32) -> (i32, i32) {
    %c0_i32 = arith.constant 0 : i32
    %c0_i32_0 = arith.constant 0 : i32
    return %arg0, %c0_i32 : i32, i32
  }
  func.func @transform_1(%arg0: i32) -> (i32, i32) {
    %c0_i32 = arith.constant 0 : i32
    %c0_i32_0 = arith.constant 0 : i32
    %c0_i32_1 = arith.constant 0 : i32
    return %c0_i32, %c0_i32_0 : i32, i32
  }
  func.func @transform_2(%arg0: i32) -> (i32, i32) {
    %c0_i32 = arith.constant 0 : i32
    %c0_i32_0 = arith.constant 0 : i32
    %c0_i32_1 = arith.constant 0 : i32
    return %c0_i32, %c0_i32_0 : i32, i32
  }
  func.func @transform_3(%arg0: i32) -> (i32, i32) {
    %c0_i32 = arith.constant 0 : i32
    %c0_i32_0 = arith.constant 0 : i32
    %c0_i32_1 = arith.constant 0 : i32
    return %c0_i32, %c0_i32_0 : i32, i32
  }
  func.func @transform_4(%arg0: i32) -> (i32, i32) {
    %c0_i32 = arith.constant 0 : i32
    %c0_i32_0 = arith.constant 0 : i32
    %c0_i32_1 = arith.constant 0 : i32
    return %c0_i32, %c0_i32_0 : i32, i32
  }
  func.func @transform_5(%arg0: i32) -> (i32, i32) {
    %c0_i32 = arith.constant 0 : i32
    %c0_i32_0 = arith.constant 0 : i32
    %c0_i32_1 = arith.constant 0 : i32
    return %c0_i32, %c0_i32_0 : i32, i32
  }
  func.func @transform_6(%arg0: i32) -> (i32, i32) {
    %c0_i32 = arith.constant 0 : i32
    %c0_i32_0 = arith.constant 0 : i32
    %c0_i32_1 = arith.constant 0 : i32
    return %c0_i32, %c0_i32_0 : i32, i32
  }
  func.func @transform_7(%arg0: i32) -> (i32, i32) {
    %c0_i32 = arith.constant 0 : i32
    %c0_i32_0 = arith.constant 0 : i32
    %c0_i32_1 = arith.constant 0 : i32
    return %c0_i32, %c0_i32_0 : i32, i32
  }
  func.func @transform_8(%arg0: i32) -> (i32, i32) {
    %c0_i32 = arith.constant 0 : i32
    %c0_i32_0 = arith.constant 0 : i32
    %c0_i32_1 = arith.constant 0 : i32
    return %c0_i32, %c0_i32_0 : i32, i32
  }
  func.func @transform_9(%arg0: i32) -> (i32, i32) {
    %c0_i32 = arith.constant 0 : i32
    %c0_i32_0 = arith.constant 0 : i32
    %c0_i32_1 = arith.constant 0 : i32
    return %c0_i32, %c0_i32_0 : i32, i32
  }
  func.func @transform_10(%arg0: i32) -> (i32, i32) {
    %c0_i32 = arith.constant 0 : i32
    %c0_i32_0 = arith.constant 0 : i32
    return %arg0, %c0_i32 : i32, i32
  }
}

</mosaic_0001>

<llo_original>
// kernel: tpu_custom_call.1
$region0: #{tpu_custom_call.1}
  #allocation0 [shape = 'u32[]', space=smem, size = 0x4, offset = 0x4, fixed_abs, tag = 'smem constant byte address 0x4 - core index']
  #allocation1 [shape = 'u32[72,128]{1,0:T(1,128)}', space=vmem, size = 0x9000, scoped, tag = 'internal scratch']
  %s0 = inlined_call_operand.vmem [shape: f32[8,8], index: 0, kind: input, shape index: {}]
  %s1 = inlined_call_operand.vmem [shape: f32[1,32], index: 1, kind: input, shape index: {}]
  %s2 = inlined_call_operand.hbm [shape: f32[1,32], index: 2, kind: input, shape index: {}]
  %s3 = inlined_call_operand.hbm [shape: f32[3,128], index: 3, kind: input, shape index: {}]
  %s4 = inlined_call_operand.hbm [shape: bf16[32,128], index: 4, kind: input, shape index: {}]
  %s5 = inlined_call_operand.hbm [shape: f32[1,128], index: 5, kind: input, shape index: {}]
  %s6 = inlined_call_operand.vmem [shape: bf16[128,128], index: 6, kind: input, shape index: {}]
  %s7 = inlined_call_operand.vmem [shape: f32[1,128], index: 7, kind: input, shape index: {}]
  %s8 = inlined_call_operand.vmem [shape: bf16[128,8], index: 8, kind: input, shape index: {}]
  %s9 = inlined_call_operand.vmem [shape: f32[1,8], index: 9, kind: input, shape index: {}]
  %s10 = inlined_call_operand.hbm [shape: f32[8,8], index: 10, kind: output, shape index: {}]
  %s11 = sld [smem:[#allocation0]]
  $region66: #{tpu_custom_call.1} parent=0
    _
  %s13 = ssub.s32 1, %s11
  %s14 = scalar_select 0, %s13, %s11
  $region1: #{tpu_custom_call.1} parent=0
    #allocation2 [shape = 'u8[512]{0}', space=vmem, size = 0x400, scoped, tag = 'input window, operand 2, single buffered']
    #allocation3 [shape = 's32[1]{0}', space=sflag, size = 0x4, scoped, tag = 'scoped memory for tpu_custom_call.1']
    #allocation4 [shape = 's32[1]{0}', space=sflag, size = 0x4, scoped, tag = 'scoped memory for tpu_custom_call.1']
    #allocation5 [shape = 'u8[2048]{0}', space=vmem, size = 0x800, scoped, tag = 'input window, operand 3, single buffered']
    #allocation6 [shape = 's32[1]{0}', space=sflag, size = 0x4, scoped, tag = 'scoped memory for tpu_custom_call.1']
    #allocation7 [shape = 'u8[8192]{0}', space=vmem, size = 0x2000, scoped, tag = 'input window, operand 4, single buffered']
    #allocation8 [shape = 'u8[512]{0}', space=vmem, size = 0x400, scoped, tag = 'input window, operand 5, single buffered']
    #allocation9 [shape = 's32[1]{0}', space=sflag, size = 0x4, scoped, tag = 'scoped memory for tpu_custom_call.1']
    #allocation10 [shape = 'u8[4096]{0}', space=vmem, size = 0x1000, scoped, tag = 'output window, operand 0, single buffered']
    %15 = vsyncpa [#allocation3], 0
    %16 = vsyncpa [#allocation6], 0
    %17 = vsyncpa [#allocation9], 0
    %18 = vsyncpa [#allocation4], 0
    // Predicated region
    $region2: #{tpu_custom_call.1} parent=1 // pred_check
      _
    $region3: #{tpu_custom_call.1} parent=1 // pred_check_branch
      %20 = sbr.rel (0) target = $region5
    $region4: #{tpu_custom_call.1} parent=1 // pred_region
      _
    $region5: #{tpu_custom_call.1} parent=1 // pred_fallthru
      _
    // Predicated region
    $region6: #{tpu_custom_call.1} parent=1 // pred_check
      _
    $region7: #{tpu_custom_call.1} parent=1 // pred_check_branch
      %22 = sbr.rel (0) target = $region9
    $region8: #{tpu_custom_call.1} parent=1 // pred_region
      _
    $region9: #{tpu_custom_call.1} parent=1 // pred_fallthru
      _
    // Predicated region
    $region10: #{tpu_custom_call.1} parent=1 // pred_check
      _
    $region11: #{tpu_custom_call.1} parent=1 // pred_check_branch
      %24 = sbr.rel (0) target = $region13
    $region12: #{tpu_custom_call.1} parent=1 // pred_region
      %26 = vsyncadd [#allocation3], 0
      %s28 = sshll.u32 %s2, 4
      %s29 = int_to_ptr.hbm [resolvable:$true] %s28
      %s30 = sshll.u32 [#allocation2], 4
      %s31 = int_to_ptr.vmem [resolvable:$true] %s30
      %33 = dma.hbm_to_vmem [thread:$0]  %s29, 16, %s31, [#allocation3]
    $region13: #{tpu_custom_call.1} parent=1 // pred_fallthru
      _
    // Predicated region
    $region14: #{tpu_custom_call.1} parent=1 // pred_check
      _
    $region15: #{tpu_custom_call.1} parent=1 // pred_check_branch
      %35 = sbr.rel (0) target = $region17
    $region16: #{tpu_custom_call.1} parent=1 // pred_region
      %37 = vsyncadd [#allocation6], 0
      %s39 = sshll.u32 %s3, 4
      %s40 = int_to_ptr.hbm [resolvable:$true] %s39
      %s41 = sshll.u32 [#allocation5], 4
      %s42 = int_to_ptr.vmem [resolvable:$true] %s41
      %44 = dma.hbm_to_vmem [thread:$0]  %s40, 64, %s42, [#allocation6]
    $region17: #{tpu_custom_call.1} parent=1 // pred_fallthru
      _
    // Predicated region
    $region18: #{tpu_custom_call.1} parent=1 // pred_check
      _
    $region19: #{tpu_custom_call.1} parent=1 // pred_check_branch
      %46 = sbr.rel (0) target = $region21
    $region20: #{tpu_custom_call.1} parent=1 // pred_region
      %48 = vsyncadd [#allocation6], 0
      %s49 = sshll.u32 %s4, 4
      %s50 = int_to_ptr.hbm [resolvable:$true] %s49
      %s51 = sshll.u32 [#allocation7], 4
      %s52 = int_to_ptr.vmem [resolvable:$true] %s51
      %57 = dma.hbm_to_vmem [thread:$0]  %s50, 256, %s52, [#allocation6], 64, 64, 4
    $region21: #{tpu_custom_call.1} parent=1 // pred_fallthru
      _
    // Predicated region
    $region22: #{tpu_custom_call.1} parent=1 // pred_check
      _
    $region23: #{tpu_custom_call.1} parent=1 // pred_check_branch
      %59 = sbr.rel (0) target = $region25
    $region24: #{tpu_custom_call.1} parent=1 // pred_region
      %61 = vsyncadd [#allocation9], 0
      %s63 = sshll.u32 %s5, 4
      %s64 = int_to_ptr.hbm [resolvable:$true] %s63
      %s65 = sshll.u32 [#allocation8], 4
      %s66 = int_to_ptr.vmem [resolvable:$true] %s65
      %68 = dma.hbm_to_vmem [thread:$0]  %s64, 16, %s66, [#allocation9]
    $region25: #{tpu_custom_call.1} parent=1 // pred_fallthru
      _
    // Predicated region
    $region26: #{tpu_custom_call.1} parent=1 // pred_check
      _
    $region27: #{tpu_custom_call.1} parent=1 // pred_check_branch
      %70 = sbr.rel (0) target = $region29
    $region28: #{tpu_custom_call.1} parent=1 // pred_region
      _
    $region29: #{tpu_custom_call.1} parent=1 // pred_fallthru
      _
    // Predicated region
    $region30: #{tpu_custom_call.1} parent=1 // pred_check
      _
    $region31: #{tpu_custom_call.1} parent=1 // pred_check_branch
      %72 = sbr.rel (0) target = $region33
    $region32: #{tpu_custom_call.1} parent=1 // pred_region
      _
    $region33: #{tpu_custom_call.1} parent=1 // pred_fallthru
      _
    // Predicated region
    $region34: #{tpu_custom_call.1} parent=1 // pred_check
      _
    $region35: #{tpu_custom_call.1} parent=1 // pred_check_branch
      %74 = sbr.rel (0) target = $region37
    $region36: #{tpu_custom_call.1} parent=1 // pred_region
      _
    $region37: #{tpu_custom_call.1} parent=1 // pred_fallthru
      _
    // Predicated region
    $region38: #{tpu_custom_call.1} parent=1 // pred_check
      _
    $region39: #{tpu_custom_call.1} parent=1 // pred_check_branch
      %76 = sbr.rel (0) target = $region41
    $region40: #{tpu_custom_call.1} parent=1 // pred_region
      _
    $region41: #{tpu_custom_call.1} parent=1 // pred_fallthru
      _
    // Predicated region
    $region42: #{tpu_custom_call.1} parent=1 // pred_check
      _
    $region43: #{tpu_custom_call.1} parent=1 // pred_check_branch
      %78 = sbr.rel (0) target = $region45
    $region44: #{tpu_custom_call.1} parent=1 // pred_region
      %80 = dma.done [#allocation3], 16
    $region45: #{tpu_custom_call.1} parent=1 // pred_fallthru
      _
    // Predicated region
    $region46: #{tpu_custom_call.1} parent=1 // pred_check
      _
    $region47: #{tpu_custom_call.1} parent=1 // pred_check_branch
      %82 = sbr.rel (0) target = $region49
    $region48: #{tpu_custom_call.1} parent=1 // pred_region
      %84 = dma.done [#allocation6], 64
    $region49: #{tpu_custom_call.1} parent=1 // pred_fallthru
      _
    // Predicated region
    $region50: #{tpu_custom_call.1} parent=1 // pred_check
      _
    $region51: #{tpu_custom_call.1} parent=1 // pred_check_branch
      %86 = sbr.rel (0) target = $region53
    $region52: #{tpu_custom_call.1} parent=1 // pred_region
      %88 = dma.done [#allocation6], 256
    $region53: #{tpu_custom_call.1} parent=1 // pred_fallthru
      _
    // Predicated region
    $region54: #{tpu_custom_call.1} parent=1 // pred_check
      _
    $region55: #{tpu_custom_call.1} parent=1 // pred_check_branch
      %90 = sbr.rel (0) target = $region57
    $region56: #{tpu_custom_call.1} parent=1 // pred_region
      %92 = dma.done [#allocation9], 16
    $region57: #{tpu_custom_call.1} parent=1 // pred_fallthru
      _
    %v94 = vld [vmem:[%s0] sm:$0xff]
    %v95 = vld [vmem:[%s1] sm:$0x1]
    %97 = vset.pattern.permute.xlu0 3
    %98 = vperm.xlu0 %97, %v94
    %v99 = vpop.permute.xlu0 %98
    %v102 = vperm.slane %v95, 0
    %v104 = vmul.f32 %v99, %v102
    %v105 = vld [vmem:[#allocation2] sm:$0x1]
    %v107 = vperm.slane %v105, 0
    %v109 = vadd.f32 %v104, %v107
    %v110 = vsub.f32 0.0, %v109
    %v111 = vmul.f32 %v110, 1.442695
    %v112 = vpow.pop %v111
    %v113 = vadd.f32 %v112, 1.0
    %v114 = vrcp.pop %v113
    %v115 = vmul.f32 %v109, %v114
    %v116 = vpack.c.bf16 %v115, %v115
    %v117 = vld [vmem:[#allocation7] sm:$0xf]
    %v118 = vld [vmem:[#allocation7 + $0x4] sm:$0xf]
    %v119 = vld [vmem:[#allocation7 + $0x8] sm:$0xf]
    %v120 = vld [vmem:[#allocation7 + $0xc] sm:$0xf]
    %v121 = vld [vmem:[#allocation8] sm:$0x1]
    %v123 = vperm.slane %v121, 0
    %v129 = vunpack.c.l.b16 %v117
    %v130 = vunpack.c.l.b16 %v118
    %v131 = vunpack.c.l.b16 %v119
    %v132 = vunpack.c.l.b16 %v120
    %v133 = vpack.c.b16 %v130, %v129
    %v134 = vpack.c.b16 %v132, %v131
    %vm137 = vcmask 261120
    %v139 = vsel %vm137, %v116, 0
    %141 = vmatpush.bf16.msra.mxu0 0
    %142 = vmatpush.bf16.msra.mxu0 0
    %143 = vmatpush.bf16.msra.mxu0 0
    %144 = vmatpush.bf16.msra.mxu0 0
    %145 = vmatpush.bf16.msra.mxu0 0
    %146 = vmatpush.bf16.msra.mxu0 0
    %147 = vmatpush.bf16.msra.mxu0 %v134
    %148 = vmatpush.bf16.msra.mxu0 %v133
    %149 = vmatmul.bf16.gmra.mxu0 %v139
    %v150 = vpop.f32.mrf.mxu0
    %v151 = vadd.f32 %v123, %v150
    %v152 = vpop.f32.mrf.mxu0
    %153 = vdwg.mxu0
    %v154 = vld [vmem:[#allocation5] sm:$0x7]
    %155 = vset.pattern.permute.xlu0 0
    %156 = vperm.xlu0 %155, %v94
    %v157 = vpop.permute.xlu0 %156
    %v159 = vperm.slane %v154, 0
    %v160 = vmul.f32 %v157, %v159
    %v161 = vadd.f32 %v151, %v160
    %162 = vset.pattern.permute.xlu0 1
    %163 = vperm.xlu0 %162, %v94
    %v164 = vpop.permute.xlu0 %163
    %v166 = vperm.slane %v154, 1
    %v167 = vmul.f32 %v164, %v166
    %v168 = vadd.f32 %v161, %v167
    %169 = vset.pattern.permute.xlu0 2
    %170 = vperm.xlu0 %169, %v94
    %v171 = vpop.permute.xlu0 %170
    %v173 = vperm.slane %v154, 2
    %v174 = vmul.f32 %v171, %v173
    %v175 = vadd.f32 %v168, %v174
    %v176 = vsub.f32 0.0, %v175
    %v177 = vmul.f32 %v176, 1.442695
    %v178 = vpow.pop %v177
    %v179 = vadd.f32 %v178, 1.0
    %v180 = vrcp.pop %v179
    %v181 = vmul.f32 %v175, %v180
    %v182 = vpack.c.bf16 %v181, %v181
    %v183 = vld [vmem:[%s6] sm:$0xf]
    %v184 = vld [vmem:[%s6 + $0x4] sm:$0xf]
    %v185 = vld [vmem:[%s6 + $0x8] sm:$0xf]
    %v186 = vld [vmem:[%s6 + $0xc] sm:$0xf]
    %v187 = vld [vmem:[%s6 + $0x10] sm:$0xf]
    %v188 = vld [vmem:[%s6 + $0x14] sm:$0xf]
    %v189 = vld [vmem:[%s6 + $0x18] sm:$0xf]
    %v190 = vld [vmem:[%s6 + $0x1c] sm:$0xf]
    %v191 = vld [vmem:[%s6 + $0x20] sm:$0xf]
    %v192 = vld [vmem:[%s6 + $0x24] sm:$0xf]
    %v193 = vld [vmem:[%s6 + $0x28] sm:$0xf]
    %v194 = vld [vmem:[%s6 + $0x2c] sm:$0xf]
    %v195 = vld [vmem:[%s6 + $0x30] sm:$0xf]
    %v196 = vld [vmem:[%s6 + $0x34] sm:$0xf]
    %v197 = vld [vmem:[%s6 + $0x38] sm:$0xf]
    %v198 = vld [vmem:[%s6 + $0x3c] sm:$0xf]
    %v199 = vld [vmem:[%s7] sm:$0x1]
    %v201 = vperm.slane %v199, 0
    %v219 = vunpack.c.l.b16 %v183
    %v220 = vunpack.c.l.b16 %v184
    %v221 = vunpack.c.l.b16 %v185
    %v222 = vunpack.c.l.b16 %v186
    %v223 = vunpack.c.l.b16 %v187
    %v224 = vunpack.c.l.b16 %v188
    %v225 = vunpack.c.l.b16 %v189
    %v226 = vunpack.c.l.b16 %v190
    %v227 = vunpack.c.l.b16 %v191
    %v228 = vunpack.c.l.b16 %v192
    %v229 = vunpack.c.l.b16 %v193
    %v230 = vunpack.c.l.b16 %v194
    %v231 = vunpack.c.l.b16 %v195
    %v232 = vunpack.c.l.b16 %v196
    %v233 = vunpack.c.l.b16 %v197
    %v234 = vunpack.c.l.b16 %v198
    %v235 = vpack.c.b16 %v220, %v219
    %v236 = vpack.c.b16 %v222, %v221
    %v237 = vpack.c.b16 %v224, %v223
    %v238 = vpack.c.b16 %v226, %v225
    %v239 = vpack.c.b16 %v228, %v227
    %v240 = vpack.c.b16 %v230, %v229
    %v241 = vpack.c.b16 %v232, %v231
    %v242 = vpack.c.b16 %v234, %v233
    %251 = vmatpush.bf16.msra.mxu0 %v242
    %252 = vmatpush.bf16.msra.mxu0 %v241
    %253 = vmatpush.bf16.msra.mxu0 %v240
    %254 = vmatpush.bf16.msra.mxu0 %v239
    %255 = vmatpush.bf16.msra.mxu0 %v238
    %256 = vmatpush.bf16.msra.mxu0 %v237
    %257 = vmatpush.bf16.msra.mxu0 %v236
    %258 = vmatpush.bf16.msra.mxu0 %v235
    %259 = vmatmul.bf16.gmra.mxu0 %v182
    %v260 = vpop.f32.mrf.mxu0
    %v261 = vadd.f32 %v201, %v260
    %v262 = vpop.f32.mrf.mxu0
    %263 = vdwg.mxu0
    %v264 = vsub.f32 0.0, %v261
    %v265 = vmul.f32 %v264, 1.442695
    %v266 = vpow.pop %v265
    %v267 = vadd.f32 %v266, 1.0
    %v268 = vrcp.pop %v267
    %v269 = vmul.f32 %v261, %v268
    %v270 = vpack.c.bf16 %v269, %v269
    %v271 = vld [vmem:[%s8] sm:$0xf]
    %v272 = vld [vmem:[%s8 + $0x4] sm:$0xf]
    %v273 = vld [vmem:[%s8 + $0x8] sm:$0xf]
    %v274 = vld [vmem:[%s8 + $0xc] sm:$0xf]
    %v275 = vld [vmem:[%s8 + $0x10] sm:$0xf]
    %v276 = vld [vmem:[%s8 + $0x14] sm:$0xf]
    %v277 = vld [vmem:[%s8 + $0x18] sm:$0xf]
    %v278 = vld [vmem:[%s8 + $0x1c] sm:$0xf]
    %v279 = vld [vmem:[%s8 + $0x20] sm:$0xf]
    %v280 = vld [vmem:[%s8 + $0x24] sm:$0xf]
    %v281 = vld [vmem:[%s8 + $0x28] sm:$0xf]
    %v282 = vld [vmem:[%s8 + $0x2c] sm:$0xf]
    %v283 = vld [vmem:[%s8 + $0x30] sm:$0xf]
    %v284 = vld [vmem:[%s8 + $0x34] sm:$0xf]
    %v285 = vld [vmem:[%s8 + $0x38] sm:$0xf]
    %v286 = vld [vmem:[%s8 + $0x3c] sm:$0xf]
    %v287 = vld [vmem:[%s9] sm:$0x1]
    %v289 = vperm.slane %v287, 0
    %v307 = vunpack.c.l.b16 %v271
    %v308 = vunpack.c.l.b16 %v272
    %v309 = vunpack.c.l.b16 %v273
    %v310 = vunpack.c.l.b16 %v274
    %v311 = vunpack.c.l.b16 %v275
    %v312 = vunpack.c.l.b16 %v276
    %v313 = vunpack.c.l.b16 %v277
    %v314 = vunpack.c.l.b16 %v278
    %v315 = vunpack.c.l.b16 %v279
    %v316 = vunpack.c.l.b16 %v280
    %v317 = vunpack.c.l.b16 %v281
    %v318 = vunpack.c.l.b16 %v282
    %v319 = vunpack.c.l.b16 %v283
    %v320 = vunpack.c.l.b16 %v284
    %v321 = vunpack.c.l.b16 %v285
    %v322 = vunpack.c.l.b16 %v286
    %v323 = vpack.c.b16 %v308, %v307
    %v324 = vpack.c.b16 %v310, %v309
    %v325 = vpack.c.b16 %v312, %v311
    %v326 = vpack.c.b16 %v314, %v313
    %v327 = vpack.c.b16 %v316, %v315
    %v328 = vpack.c.b16 %v318, %v317
    %v329 = vpack.c.b16 %v320, %v319
    %v330 = vpack.c.b16 %v322, %v321
    %339 = vmatpush.bf16.msra.mxu0 %v330
    %340 = vmatpush.bf16.msra.mxu0 %v329
    %341 = vmatpush.bf16.msra.mxu0 %v328
    %342 = vmatpush.bf16.msra.mxu0 %v327
    %343 = vmatpush.bf16.msra.mxu0 %v326
    %344 = vmatpush.bf16.msra.mxu0 %v325
    %345 = vmatpush.bf16.msra.mxu0 %v324
    %346 = vmatpush.bf16.msra.mxu0 %v323
    %347 = vmatmul.bf16.gmra.mxu0 %v270
    %v348 = vpop.f32.mrf.mxu0
    %v349 = vadd.f32 %v289, %v348
    %v350 = vpop.f32.mrf.mxu0
    %351 = vdwg.mxu0
    %vm352 = vcmask 64512
    %353 = vst.msk [vmem:[#allocation10] sm:$0xff] %vm352, %v349
    // Predicated region
    $region58: #{tpu_custom_call.1} parent=1 // pred_check
      _
    $region59: #{tpu_custom_call.1} parent=1 // pred_check_branch
      %355 = sbr.rel (0) target = $region61
    $region60: #{tpu_custom_call.1} parent=1 // pred_region
      %357 = vsyncadd [#allocation4], 0
      %s359 = sshll.u32 [#allocation10], 4
      %s360 = int_to_ptr.vmem [resolvable:$true] %s359
      %s361 = sshll.u32 %s10, 4
      %s362 = int_to_ptr.hbm [resolvable:$true] %s361
      %364 = dma.vmem_to_hbm [thread:$0]  %s360, 128, %s362, [#allocation4]
    $region61: #{tpu_custom_call.1} parent=1 // pred_fallthru
      _
    // Predicated region
    $region62: #{tpu_custom_call.1} parent=1 // pred_check
      _
    $region63: #{tpu_custom_call.1} parent=1 // pred_check_branch
      %366 = sbr.rel (0) target = $region65
    $region64: #{tpu_custom_call.1} parent=1 // pred_region
      %368 = dma.done [#allocation4], 128
    $region65: #{tpu_custom_call.1} parent=1 // pred_fallthru
      _
    %369 = vsyncpa [#allocation3], 1
    %370 = vsyncpa [#allocation6], 1
    %371 = vsyncpa [#allocation9], 1
    %372 = vsyncpa [#allocation4], 1

</llo_original>
